<compile_context>
chip_gen: v5e
topology: v5e:2x2
jax: 0.10.0
libtpu: 0.0.40
codegen_flags: <defaults>
</compile_context>

<pallas_src>
import functools

import jax
import jax.numpy as jnp
from jax.experimental import pallas as pl
from jax.experimental.pallas import tpu as pltpu


# ---------------------------------------------------------------------------
# Pallas kernel
# ---------------------------------------------------------------------------
def _rotary_kernel(*refs, n_tensors, rot_half, headdim):
    """refs = (x_0 .. x_{n-1}, cos, sin, o_0 .. o_{n-1}).

    x_i / o_i blocks : (Hblk, TS, D)
    cos block        : (1, TS, D) fp32 = [ cos | cos | 1 ]
    sin block        : (1, TS, D) fp32 = [-sin | sin | 0 ]
    """
    cos = refs[n_tensors][0]          # (TS, D)
    sin = refs[n_tensors + 1][0]      # (TS, D)
    full = (2 * rot_half == headdim)

    def rotate(x):                    # x: (TS, D) fp32
        if full:
            # Full-width rotate-half: one XLU lane-rotate + full-lane VPU
            # mul/add (signs already baked into the sin table; a roll by
            # exactly D/2 is its own inverse, so direction is irrelevant).
            return x * cos + pltpu.roll(x, shift=rot_half, axis=1) * sin
        # Partial rotary (rotary_dim < headdim): slice the two halves of the
        # loaded value, rotate them, and reassemble with one lane concat so
        # the store stays full lane width.
        r2 = rot_half
        x1 = x[:, :r2]
        x2 = x[:, r2:2 * r2]
        o1 = x1 * cos[:, :r2] + x2 * sin[:, :r2]              # x1*cos - x2*sin
        o2 = x2 * cos[:, r2:2 * r2] + x1 * sin[:, r2:2 * r2]  # x2*cos + x1*sin
        parts = [o1, o2]
        if 2 * r2 < headdim:
            parts.append(x[:, 2 * r2:])                        # tail passthrough
        return jnp.concatenate(parts, axis=1)

    for x_ref, o_ref in zip(refs[:n_tensors], refs[n_tensors + 2:]):
        for h in range(x_ref.shape[0]):            # small static unroll (capped)
            o_ref[h] = rotate(x_ref[h].astype(jnp.float32)).astype(o_ref.dtype)


# ---------------------------------------------------------------------------
# Tiling heuristics
# ---------------------------------------------------------------------------
def _choose_tiles(n_rows, hgroup, S, D, itemsize, n_tensors, max_hblk=8):
    """Pick (heads-per-block, seq-tile).

    n_rows : collapsed B*H rows of the tensor(s)
    hgroup : heads-per-block must divide this (H when cos is per-batch,
             n_rows when cos is shared across the batch)
    """
    # Conservative budget: fits the default scoped-VMEM limit on v5e/v6e and
    # v7x's smaller physical VMEM.
    budget = 12 * 1024 * 1024

    def step_bytes(hblk, ts):
        data = 2 * n_tensors * hblk * ts * D * itemsize * 2   # in+out, double-buffered
        tables = 2 * ts * D * 4 * 2                           # cos+sin fp32, double-buffered
        return data + tables

    # Sequence tile: full S when small; otherwise a large multiple of 8
    # dividing S; shrink further while over budget.
    ts = S
    if S > 2048 and S % 8 == 0:
        ts = 2048
        while S % ts:
            ts //= 2
    while step_bytes(1, ts) > budget and ts % 16 == 0:
        ts //= 2

    # Heads per block: largest divisor of hgroup (capped so the in-kernel
    # unroll stays small) that fits the budget while leaving >= 2 grid steps
    # (megacore sharding); else the largest fitting divisor.
    cap = min(hgroup, max_hblk)
    divisors = [d for d in range(cap, 0, -1) if hgroup % d == 0]
    fitting = [d for d in divisors if step_bytes(d, ts) <= budget] or [1]
    for d in fitting:
        if (n_rows // d) * (S // ts) >= 2:
            return d, ts
    return fitting[0], ts


# ---------------------------------------------------------------------------
# pallas_call wrapper
# ---------------------------------------------------------------------------
def _apply_rotary(tensors, cos_full, sin_full, rot_half):
    """tensors: tuple of arrays, each (B, H, S, D) with identical shape.
    cos_full / sin_full: (Bc, S, D) fp32, Bc in {1, B}."""
    B, H, S, D = tensors[0].shape
    for t in tensors[1:]:
        assert t.shape == tensors[0].shape
    Bc = cos_full.shape[0]
    assert Bc in (1, B), "cos/sin batch dim must be 1 or match q/k batch"

    n = len(tensors)
    n_rows = B * H
    hgroup = n_rows if Bc == 1 else H
    itemsize = max(jnp.dtype(t.dtype).itemsize for t in tensors)
    hblk, ts = _choose_tiles(n_rows, hgroup, S, D, itemsize, n)

    flat = [t.reshape(n_rows, S, D) for t in tensors]     # free metadata reshape
    # Grid order (seq_tiles, row_blocks): cos/sin block index is constant
    # across the inner row loop, so its DMA is skipped by the pipeline.
    grid = (S // ts, n_rows // hblk)

    x_spec = pl.BlockSpec((hblk, ts, D), lambda j, i: (i, j, 0))
    if Bc == 1:
        cs_spec = pl.BlockSpec((1, ts, D), lambda j, i: (0, j, 0))
    else:
        cs_spec = pl.BlockSpec((1, ts, D), lambda j, i: ((i * hblk) // H, j, 0))

    kernel = functools.partial(
        _rotary_kernel, n_tensors=n, rot_half=rot_half, headdim=D)

    outs = pl.pallas_call(
        kernel,
        out_shape=tuple(
            jax.ShapeDtypeStruct((n_rows, S, D), t.dtype) for t in tensors),
        grid_spec=pltpu.PrefetchScalarGridSpec(
            num_scalar_prefetch=0,
            grid=grid,
            in_specs=[x_spec] * n + [cs_spec, cs_spec],
            out_specs=[x_spec] * n,
        ),
        compiler_params=pltpu.CompilerParams(
            dimension_semantics=("parallel", "parallel")),
    )(*flat, cos_full, sin_full)

    return tuple(o.reshape(B, H, S, D) for o in outs)


# ---------------------------------------------------------------------------
# Module wrapper (cos/sin cache + gather + table expansion is plain-JAX glue)
# ---------------------------------------------------------------------------
class FastRotaryEmbedding:
    def __init__(self, dim, base=10000, interleaved=False, scale_base=None,
                 pos_idx_in_fp32=True):
        if interleaved:
            # TODO(synk): interleaved=True (GPT-J even/odd pairing) not implemented.
            raise NotImplementedError("interleaved=True is not supported")
        if scale_base is not None:
            # TODO(synk): scale_base (XPos scaling) not implemented.
            raise NotImplementedError("scale_base (XPos) is not supported")
        self.dim = dim
        self.base = base
        self.interleaved = interleaved
        self.scale_base = scale_base
        self.pos_idx_in_fp32 = pos_idx_in_fp32
        self.inv_freq = 1.0 / (
            base ** (jnp.arange(0, dim, 2, dtype=jnp.float32) / dim))
        self._seq_len_cached = 0
        self._cos_cached = None
        self._sin_cached = None
        # expanded lane-dense tables built at layer 0 and reused for layers > 0
        self.cos = None
        self.sin = None
        self._rot_half = dim // 2

    def _update_cos_sin_cache(self, seqlen):
        if seqlen > self._seq_len_cached:
            self._seq_len_cached = seqlen
            t = jnp.arange(seqlen, dtype=jnp.float32)
            freqs = jnp.einsum("i,j->ij", t, self.inv_freq)   # (seqlen, dim/2)
            # Keep the cache in fp32 (no low-precision round trip).
            self._cos_cached = jnp.cos(freqs)
            self._sin_cached = jnp.sin(freqs)

    def __call__(self, q, k, position_id, max_seqlen, layer_id=0):
        """
        q: (batch, nheads, seqlen, headdim)
        k: (batch, nheads_k, seqlen, headdim)   (nheads_k may differ: GQA/MQA)
        position_id: (batch, seqlen) or (1, seqlen) int
        """
        B, _, S, D = q.shape
        if layer_id == 0:
            self._update_cos_sin_cache(max_seqlen)
            # Gather per-position rows; keep the batch dim at 1 when positions
            # are shared (no B x duplicated cos/sin HBM traffic).
            cos = self._cos_cached[position_id]     # (Bp, S, R2) fp32
            sin = self._sin_cached[position_id]
            r2 = cos.shape[-1]
            if 2 * r2 > D:
                raise ValueError("rotary_dim must be <= headdim")
            tail = D - 2 * r2
            pad1 = jnp.ones(cos.shape[:-1] + (tail,), jnp.float32)
            pad0 = jnp.zeros(cos.shape[:-1] + (tail,), jnp.float32)
            self.cos = jnp.concatenate([cos, cos, pad1], axis=-1)    # (Bp, S, D)
            self.sin = jnp.concatenate([-sin, sin, pad0], axis=-1)   # (Bp, S, D)
            self._rot_half = r2

        if q.shape == k.shape:
            q_out, k_out = _apply_rotary((q, k), self.cos, self.sin, self._rot_half)
            return q_out, k_out
        # GQA / MQA: different head counts -> independent calls.
        (q_out,) = _apply_rotary((q,), self.cos, self.sin, self._rot_half)
        (k_out,) = _apply_rotary((k,), self.cos, self.sin, self._rot_half)
        return q_out, k_out


# ---------------------------------------------------------------------------
# Pure-JAX reference for sanity checking
# ---------------------------------------------------------------------------
def _ref_cos_sin(position_id, rotary_dim, base):
    inv_freq = 1.0 / (
        base ** (jnp.arange(0, rotary_dim, 2, dtype=jnp.float32) / rotary_dim))
    freqs = position_id.astype(jnp.float32)[..., None] * inv_freq   # (Bp, S, R2)
    return jnp.cos(freqs), jnp.sin(freqs)


def _rotary_ref(x, cos, sin):
    r2 = cos.shape[-1]
    c = cos[:, None].astype(jnp.float32)
    s = sin[:, None].astype(jnp.float32)
    xf = x.astype(jnp.float32)
    x1, x2 = xf[..., :r2], xf[..., r2:2 * r2]
    o1 = x1 * c - x2 * s
    o2 = x1 * s + x2 * c
    return jnp.concatenate([o1, o2, xf[..., 2 * r2:]], axis=-1).astype(x.dtype)


if __name__ == "__main__":
    key = jax.random.PRNGKey(0)
    k1, k2, k3, k4 = jax.random.split(key, 4)

    B, H, S, D = 2, 4, 8, 128

    # ---- Test A: full rotary (rotary_dim == headdim), positions shared across batch
    q = jax.random.normal(k1, (B, H, S, D), dtype=jnp.float32)
    k = jax.random.normal(k2, (B, H, S, D), dtype=jnp.float32)
    pos = jnp.arange(S, dtype=jnp.int32)[None, :]            # (1, S) shared
    rope = FastRotaryEmbedding(D)
    q_out, k_out = rope(q, k, pos, max_seqlen=S, layer_id=0)
    jax.block_until_ready((q_out, k_out))
    cos_r, sin_r = _ref_cos_sin(pos, D, rope.base)
    assert jnp.allclose(q_out, _rotary_ref(q, cos_r, sin_r), atol=1e-5, rtol=1e-5)
    assert jnp.allclose(k_out, _rotary_ref(k, cos_r, sin_r), atol=1e-5, rtol=1e-5)

    # layer_id != 0 reuses the cached tables (matches the PyTorch module)
    q_out2, k_out2 = rope(q, k, pos, max_seqlen=S, layer_id=1)
    jax.block_until_ready((q_out2, k_out2))
    assert jnp.allclose(q_out2, q_out) and jnp.allclose(k_out2, k_out)

    # ---- Test B: partial rotary (rotary_dim < headdim), per-batch positions
    rot = 64
    pos_b = jnp.stack([jnp.arange(S, dtype=jnp.int32),
                       jnp.arange(S, dtype=jnp.int32) + 3])   # (B, S), distinct offsets
    qb = jax.random.normal(k3, (B, H, S, D), dtype=jnp.float32)
    kb = jax.random.normal(k4, (B, H, S, D), dtype=jnp.float32)
    rope_b = FastRotaryEmbedding(rot)
    qb_out, kb_out = rope_b(qb, kb, pos_b, max_seqlen=S + 3, layer_id=0)
    jax.block_until_ready((qb_out, kb_out))
    cos_rb, sin_rb = _ref_cos_sin(pos_b, rot, rope_b.base)
    assert jnp.allclose(qb_out, _rotary_ref(qb, cos_rb, sin_rb), atol=1e-5, rtol=1e-5)
    assert jnp.allclose(kb_out, _rotary_ref(kb, cos_rb, sin_rb), atol=1e-5, rtol=1e-5)

    # ---- Test C: GQA (k has fewer heads) -> single-tensor path
    kg = jax.random.normal(k2, (B, 2, S, D), dtype=jnp.float32)
    qg_out, kg_out = rope(q, kg, pos, max_seqlen=S, layer_id=1)
    jax.block_until_ready((qg_out, kg_out))
    assert jnp.allclose(kg_out, _rotary_ref(kg, cos_r, sin_r), atol=1e-5, rtol=1e-5)

    print("KERNEL_OK")
</pallas_src>

<mosaic_0001>
module attributes {stable_mosaic.version = 11 : i64} {
  func.func @_rotary_kernel(%arg0: i32, %arg1: i32, %arg2: memref<4x8x128xf32, #tpu.memory_space<vmem>>, %arg3: memref<4x8x128xf32, #tpu.memory_space<vmem>>, %arg4: memref<1x8x128xf32, #tpu.memory_space<vmem>>, %arg5: memref<1x8x128xf32, #tpu.memory_space<vmem>>, %arg6: memref<4x8x128xf32, #tpu.memory_space<vmem>>, %arg7: memref<4x8x128xf32, #tpu.memory_space<vmem>>) attributes {dimension_semantics = [#tpu.dimension_semantics<parallel>, #tpu.dimension_semantics<parallel>], iteration_bounds = array<i64: 1, 2>, scalar_prefetch = 0 : i64, scratch_operands = 0 : i64, tpu.core_type = #tpu.core_type<tc>, window_params = [{transform_indices = @transform_0, window_bounds = array<i64: 4, 8, 128>}, {transform_indices = @transform_1, window_bounds = array<i64: 4, 8, 128>}, {transform_indices = @transform_2, window_bounds = array<i64: 1, 8, 128>}, {transform_indices = @transform_3, window_bounds = array<i64: 1, 8, 128>}, {transform_indices = @transform_4, window_bounds = array<i64: 4, 8, 128>}, {transform_indices = @transform_5, window_bounds = array<i64: 4, 8, 128>}]} {
    %c0 = arith.constant 0 : index
    %c0_0 = arith.constant 0 : index
    %c0_1 = arith.constant 0 : index
    %0 = vector.load %arg4[%c0, %c0_0, %c0_1] : memref<1x8x128xf32, #tpu.memory_space<vmem>>, vector<1x8x128xf32>
    %1 = vector.shape_cast %0 : vector<1x8x128xf32> to vector<8x128xf32>
    %c0_2 = arith.constant 0 : index
    %c0_3 = arith.constant 0 : index
    %c0_4 = arith.constant 0 : index
    %2 = vector.load %arg5[%c0_2, %c0_3, %c0_4] : memref<1x8x128xf32, #tpu.memory_space<vmem>>, vector<1x8x128xf32>
    %3 = vector.shape_cast %2 : vector<1x8x128xf32> to vector<8x128xf32>
    %c0_5 = arith.constant 0 : index
    %c0_6 = arith.constant 0 : index
    %c0_7 = arith.constant 0 : index
    %4 = vector.load %arg2[%c0_5, %c0_6, %c0_7] : memref<4x8x128xf32, #tpu.memory_space<vmem>>, vector<1x8x128xf32>
    %5 = vector.shape_cast %4 : vector<1x8x128xf32> to vector<8x128xf32>
    %6 = arith.mulf %5, %1 : vector<8x128xf32>
    %c64_i32 = arith.constant 64 : i32
    %7 = tpu.dynamic_rotate %5 by %c64_i32 dim 1 : vector<8x128xf32>, i32 -> vector<8x128xf32>
    %8 = arith.mulf %7, %3 : vector<8x128xf32>
    %9 = arith.addf %6, %8 : vector<8x128xf32>
    %c0_8 = arith.constant 0 : index
    %c0_9 = arith.constant 0 : index
    %c0_10 = arith.constant 0 : index
    %10 = vector.load %arg6[%c0_8, %c0_9, %c0_10] : memref<4x8x128xf32, #tpu.memory_space<vmem>>, vector<1x8x128xf32>
    %11 = vector.shape_cast %10 : vector<1x8x128xf32> to vector<8x128xf32>
    %12 = vector.shape_cast %9 : vector<8x128xf32> to vector<1x8x128xf32>
    tpu.vector_store %arg6[%c0_8, %c0_9, %c0_10], %12 {strides = array<i32>} : memref<4x8x128xf32, #tpu.memory_space<vmem>>, vector<1x8x128xf32>,
    %c1 = arith.constant 1 : index
    %c0_11 = arith.constant 0 : index
    %c0_12 = arith.constant 0 : index
    %13 = vector.load %arg2[%c1, %c0_11, %c0_12] : memref<4x8x128xf32, #tpu.memory_space<vmem>>, vector<1x8x128xf32>
    %14 = vector.shape_cast %13 : vector<1x8x128xf32> to vector<8x128xf32>
    %15 = arith.mulf %14, %1 : vector<8x128xf32>
    %c64_i32_13 = arith.constant 64 : i32
    %16 = tpu.dynamic_rotate %14 by %c64_i32_13 dim 1 : vector<8x128xf32>, i32 -> vector<8x128xf32>
    %17 = arith.mulf %16, %3 : vector<8x128xf32>
    %18 = arith.addf %15, %17 : vector<8x128xf32>
    %c1_14 = arith.constant 1 : index
    %c0_15 = arith.constant 0 : index
    %c0_16 = arith.constant 0 : index
    %19 = vector.load %arg6[%c1_14, %c0_15, %c0_16] : memref<4x8x128xf32, #tpu.memory_space<vmem>>, vector<1x8x128xf32>
    %20 = vector.shape_cast %19 : vector<1x8x128xf32> to vector<8x128xf32>
    %21 = vector.shape_cast %18 : vector<8x128xf32> to vector<1x8x128xf32>
    tpu.vector_store %arg6[%c1_14, %c0_15, %c0_16], %21 {strides = array<i32>} : memref<4x8x128xf32, #tpu.memory_space<vmem>>, vector<1x8x128xf32>,
    %c2 = arith.constant 2 : index
    %c0_17 = arith.constant 0 : index
    %c0_18 = arith.constant 0 : index
    %22 = vector.load %arg2[%c2, %c0_17, %c0_18] : memref<4x8x128xf32, #tpu.memory_space<vmem>>, vector<1x8x128xf32>
    %23 = vector.shape_cast %22 : vector<1x8x128xf32> to vector<8x128xf32>
    %24 = arith.mulf %23, %1 : vector<8x128xf32>
    %c64_i32_19 = arith.constant 64 : i32
    %25 = tpu.dynamic_rotate %23 by %c64_i32_19 dim 1 : vector<8x128xf32>, i32 -> vector<8x128xf32>
    %26 = arith.mulf %25, %3 : vector<8x128xf32>
    %27 = arith.addf %24, %26 : vector<8x128xf32>
    %c2_20 = arith.constant 2 : index
    %c0_21 = arith.constant 0 : index
    %c0_22 = arith.constant 0 : index
    %28 = vector.load %arg6[%c2_20, %c0_21, %c0_22] : memref<4x8x128xf32, #tpu.memory_space<vmem>>, vector<1x8x128xf32>
    %29 = vector.shape_cast %28 : vector<1x8x128xf32> to vector<8x128xf32>
    %30 = vector.shape_cast %27 : vector<8x128xf32> to vector<1x8x128xf32>
    tpu.vector_store %arg6[%c2_20, %c0_21, %c0_22], %30 {strides = array<i32>} : memref<4x8x128xf32, #tpu.memory_space<vmem>>, vector<1x8x128xf32>,
    %c3 = arith.constant 3 : index
    %c0_23 = arith.constant 0 : index
    %c0_24 = arith.constant 0 : index
    %31 = vector.load %arg2[%c3, %c0_23, %c0_24] : memref<4x8x128xf32, #tpu.memory_space<vmem>>, vector<1x8x128xf32>
    %32 = vector.shape_cast %31 : vector<1x8x128xf32> to vector<8x128xf32>
    %33 = arith.mulf %32, %1 : vector<8x128xf32>
    %c64_i32_25 = arith.constant 64 : i32
    %34 = tpu.dynamic_rotate %32 by %c64_i32_25 dim 1 : vector<8x128xf32>, i32 -> vector<8x128xf32>
    %35 = arith.mulf %34, %3 : vector<8x128xf32>
    %36 = arith.addf %33, %35 : vector<8x128xf32>
    %c3_26 = arith.constant 3 : index
    %c0_27 = arith.constant 0 : index
    %c0_28 = arith.constant 0 : index
    %37 = vector.load %arg6[%c3_26, %c0_27, %c0_28] : memref<4x8x128xf32, #tpu.memory_space<vmem>>, vector<1x8x128xf32>
    %38 = vector.shape_cast %37 : vector<1x8x128xf32> to vector<8x128xf32>
    %39 = vector.shape_cast %36 : vector<8x128xf32> to vector<1x8x128xf32>
    tpu.vector_store %arg6[%c3_26, %c0_27, %c0_28], %39 {strides = array<i32>} : memref<4x8x128xf32, #tpu.memory_space<vmem>>, vector<1x8x128xf32>,
    %c0_29 = arith.constant 0 : index
    %c0_30 = arith.constant 0 : index
    %c0_31 = arith.constant 0 : index
    %40 = vector.load %arg3[%c0_29, %c0_30, %c0_31] : memref<4x8x128xf32, #tpu.memory_space<vmem>>, vector<1x8x128xf32>
    %41 = vector.shape_cast %40 : vector<1x8x128xf32> to vector<8x128xf32>
    %42 = arith.mulf %41, %1 : vector<8x128xf32>
    %c64_i32_32 = arith.constant 64 : i32
    %43 = tpu.dynamic_rotate %41 by %c64_i32_32 dim 1 : vector<8x128xf32>, i32 -> vector<8x128xf32>
    %44 = arith.mulf %43, %3 : vector<8x128xf32>
    %45 = arith.addf %42, %44 : vector<8x128xf32>
    %c0_33 = arith.constant 0 : index
    %c0_34 = arith.constant 0 : index
    %c0_35 = arith.constant 0 : index
    %46 = vector.load %arg7[%c0_33, %c0_34, %c0_35] : memref<4x8x128xf32, #tpu.memory_space<vmem>>, vector<1x8x128xf32>
    %47 = vector.shape_cast %46 : vector<1x8x128xf32> to vector<8x128xf32>
    %48 = vector.shape_cast %45 : vector<8x128xf32> to vector<1x8x128xf32>
    tpu.vector_store %arg7[%c0_33, %c0_34, %c0_35], %48 {strides = array<i32>} : memref<4x8x128xf32, #tpu.memory_space<vmem>>, vector<1x8x128xf32>,
    %c1_36 = arith.constant 1 : index
    %c0_37 = arith.constant 0 : index
    %c0_38 = arith.constant 0 : index
    %49 = vector.load %arg3[%c1_36, %c0_37, %c0_38] : memref<4x8x128xf32, #tpu.memory_space<vmem>>, vector<1x8x128xf32>
    %50 = vector.shape_cast %49 : vector<1x8x128xf32> to vector<8x128xf32>
    %51 = arith.mulf %50, %1 : vector<8x128xf32>
    %c64_i32_39 = arith.constant 64 : i32
    %52 = tpu.dynamic_rotate %50 by %c64_i32_39 dim 1 : vector<8x128xf32>, i32 -> vector<8x128xf32>
    %53 = arith.mulf %52, %3 : vector<8x128xf32>
    %54 = arith.addf %51, %53 : vector<8x128xf32>
    %c1_40 = arith.constant 1 : index
    %c0_41 = arith.constant 0 : index
    %c0_42 = arith.constant 0 : index
    %55 = vector.load %arg7[%c1_40, %c0_41, %c0_42] : memref<4x8x128xf32, #tpu.memory_space<vmem>>, vector<1x8x128xf32>
    %56 = vector.shape_cast %55 : vector<1x8x128xf32> to vector<8x128xf32>
    %57 = vector.shape_cast %54 : vector<8x128xf32> to vector<1x8x128xf32>
    tpu.vector_store %arg7[%c1_40, %c0_41, %c0_42], %57 {strides = array<i32>} : memref<4x8x128xf32, #tpu.memory_space<vmem>>, vector<1x8x128xf32>,
    %c2_43 = arith.constant 2 : index
    %c0_44 = arith.constant 0 : index
    %c0_45 = arith.constant 0 : index
    %58 = vector.load %arg3[%c2_43, %c0_44, %c0_45] : memref<4x8x128xf32, #tpu.memory_space<vmem>>, vector<1x8x128xf32>
    %59 = vector.shape_cast %58 : vector<1x8x128xf32> to vector<8x128xf32>
    %60 = arith.mulf %59, %1 : vector<8x128xf32>
    %c64_i32_46 = arith.constant 64 : i32
    %61 = tpu.dynamic_rotate %59 by %c64_i32_46 dim 1 : vector<8x128xf32>, i32 -> vector<8x128xf32>
    %62 = arith.mulf %61, %3 : vector<8x128xf32>
    %63 = arith.addf %60, %62 : vector<8x128xf32>
    %c2_47 = arith.constant 2 : index
    %c0_48 = arith.constant 0 : index
    %c0_49 = arith.constant 0 : index
    %64 = vector.load %arg7[%c2_47, %c0_48, %c0_49] : memref<4x8x128xf32, #tpu.memory_space<vmem>>, vector<1x8x128xf32>
    %65 = vector.shape_cast %64 : vector<1x8x128xf32> to vector<8x128xf32>
    %66 = vector.shape_cast %63 : vector<8x128xf32> to vector<1x8x128xf32>
    tpu.vector_store %arg7[%c2_47, %c0_48, %c0_49], %66 {strides = array<i32>} : memref<4x8x128xf32, #tpu.memory_space<vmem>>, vector<1x8x128xf32>,
    %c3_50 = arith.constant 3 : index
    %c0_51 = arith.constant 0 : index
    %c0_52 = arith.constant 0 : index
    %67 = vector.load %arg3[%c3_50, %c0_51, %c0_52] : memref<4x8x128xf32, #tpu.memory_space<vmem>>, vector<1x8x128xf32>
    %68 = vector.shape_cast %67 : vector<1x8x128xf32> to vector<8x128xf32>
    %69 = arith.mulf %68, %1 : vector<8x128xf32>
    %c64_i32_53 = arith.constant 64 : i32
    %70 = tpu.dynamic_rotate %68 by %c64_i32_53 dim 1 : vector<8x128xf32>, i32 -> vector<8x128xf32>
    %71 = arith.mulf %70, %3 : vector<8x128xf32>
    %72 = arith.addf %69, %71 : vector<8x128xf32>
    %c3_54 = arith.constant 3 : index
    %c0_55 = arith.constant 0 : index
    %c0_56 = arith.constant 0 : index
    %73 = vector.load %arg7[%c3_54, %c0_55, %c0_56] : memref<4x8x128xf32, #tpu.memory_space<vmem>>, vector<1x8x128xf32>
    %74 = vector.shape_cast %73 : vector<1x8x128xf32> to vector<8x128xf32>
    %75 = vector.shape_cast %72 : vector<8x128xf32> to vector<1x8x128xf32>
    tpu.vector_store %arg7[%c3_54, %c0_55, %c0_56], %75 {strides = array<i32>} : memref<4x8x128xf32, #tpu.memory_space<vmem>>, vector<1x8x128xf32>,
    return
  }
  func.func @transform_0(%arg0: i32, %arg1: i32) -> (i32, i32, i32) {
    %c0_i32 = arith.constant 0 : i32
    %c0_i32_0 = arith.constant 0 : i32
    return %arg1, %arg0, %c0_i32 : i32, i32, i32
  }
  func.func @transform_1(%arg0: i32, %arg1: i32) -> (i32, i32, i32) {
    %c0_i32 = arith.constant 0 : i32
    %c0_i32_0 = arith.constant 0 : i32
    return %arg1, %arg0, %c0_i32 : i32, i32, i32
  }
  func.func @transform_2(%arg0: i32, %arg1: i32) -> (i32, i32, i32) {
    %c0_i32 = arith.constant 0 : i32
    %c0_i32_0 = arith.constant 0 : i32
    %c0_i32_1 = arith.constant 0 : i32
    return %c0_i32, %arg0, %c0_i32_0 : i32, i32, i32
  }
  func.func @transform_3(%arg0: i32, %arg1: i32) -> (i32, i32, i32) {
    %c0_i32 = arith.constant 0 : i32
    %c0_i32_0 = arith.constant 0 : i32
    %c0_i32_1 = arith.constant 0 : i32
    return %c0_i32, %arg0, %c0_i32_0 : i32, i32, i32
  }
  func.func @transform_4(%arg0: i32, %arg1: i32) -> (i32, i32, i32) {
    %c0_i32 = arith.constant 0 : i32
    %c0_i32_0 = arith.constant 0 : i32
    return %arg1, %arg0, %c0_i32 : i32, i32, i32
  }
  func.func @transform_5(%arg0: i32, %arg1: i32) -> (i32, i32, i32) {
    %c0_i32 = arith.constant 0 : i32
    %c0_i32_0 = arith.constant 0 : i32
    return %arg1, %arg0, %c0_i32 : i32, i32, i32
  }
}

</mosaic_0001>

<llo_original>
// kernel: tpu_custom_call.1
$region0: #{tpu_custom_call.1}
  #allocation0 [shape = 'u32[]', space=smem, size = 0x4, offset = 0x4, fixed_abs, tag = 'smem constant byte address 0x4 - core index']
  #allocation1 [shape = 'u32[72,128]{1,0:T(1,128)}', space=vmem, size = 0x9000, scoped, tag = 'internal scratch']
  %s0 = inlined_call_operand.hbm [shape: f32[8,8,128], index: 0, kind: input, shape index: {}]
  %s1 = inlined_call_operand.hbm [shape: f32[8,8,128], index: 1, kind: input, shape index: {}]
  %s2 = inlined_call_operand.hbm [shape: f32[1,8,128], index: 2, kind: input, shape index: {}]
  %s3 = inlined_call_operand.hbm [shape: f32[1,8,128], index: 3, kind: input, shape index: {}]
  %s4 = inlined_call_operand.hbm [shape: f32[8,8,128], index: 4, kind: output, shape index: {0}]
  %s5 = inlined_call_operand.hbm [shape: f32[8,8,128], index: 5, kind: output, shape index: {1}]
  %6 = xla_tuple %s4, %s5
  %s7 = sld [smem:[#allocation0]]
  $region73: #{tpu_custom_call.1} parent=0
    _
  %s9 = ssub.s32 1, %s7
  %s10 = scalar_select 0, %s9, %s7
  $region1: #{tpu_custom_call.1} parent=0
    #allocation2 [shape = 'u8[32768]{0}', space=vmem, size = 0x8000, scoped, tag = 'input window, operand 0']
    #allocation3 [shape = 's32[2]{0}', space=sflag, size = 0x8, scoped, tag = 'scoped memory for tpu_custom_call.1']
    #allocation4 [shape = 's32[2]{0}', space=sflag, size = 0x8, scoped, tag = 'scoped memory for tpu_custom_call.1']
    #allocation5 [shape = 'u8[32768]{0}', space=vmem, size = 0x8000, scoped, tag = 'input window, operand 1']
    #allocation6 [shape = 's32[2]{0}', space=sflag, size = 0x8, scoped, tag = 'scoped memory for tpu_custom_call.1']
    #allocation7 [shape = 'u8[4096]{0}', space=vmem, size = 0x1000, scoped, tag = 'input window, operand 2, single buffered']
    #allocation8 [shape = 'u8[4096]{0}', space=vmem, size = 0x1000, scoped, tag = 'input window, operand 3, single buffered']
    #allocation9 [shape = 's32[1]{0}', space=sflag, size = 0x4, scoped, tag = 'scoped memory for tpu_custom_call.1']
    #allocation10 [shape = 'u8[32768]{0}', space=vmem, size = 0x8000, scoped, tag = 'output window, operand 0']
    #allocation11 [shape = 'u8[32768]{0}', space=vmem, size = 0x8000, scoped, tag = 'output window, operand 1']
    #allocation12 [shape = 's32[2]{0}', space=sflag, size = 0x8, scoped, tag = 'scoped memory for tpu_custom_call.1']
    %11 = vsyncpa [#allocation3], 0
    %s12 = scalar_lea.sflag [#allocation3], 1
    %13 = vsyncpa %s12, 0
    %14 = vsyncpa [#allocation6], 0
    %s15 = scalar_lea.sflag [#allocation6], 1
    %16 = vsyncpa %s15, 0
    %17 = vsyncpa [#allocation9], 0
    %18 = vsyncpa [#allocation4], 0
    %s19 = scalar_lea.sflag [#allocation4], 1
    %20 = vsyncpa %s19, 0
    %21 = vsyncpa [#allocation12], 0
    %s22 = scalar_lea.sflag [#allocation12], 1
    %23 = vsyncpa %s22, 0
    loop: start=0, step=1, limit=4
    $region2: #{tpu_custom_call.1} parent=1 // loop_pre_header
      _
    $region3: #{tpu_custom_call.1} parent=1 // loop_header
      %s25 = sphi 0, %s29
      %p26 = scmp.ge.s32.totalorder %s25, 4
      %s32 = sphi 0, %s44
      %s33 = sphi 0, %s40
      %s34 = sphi 0, %s32
      %s35 = sphi 0, %s33
      %s36 = sphi 0, %s34
      %s37 = sphi 0, %s35
      %s49 = sphi 0, %s51
      %s52 = sphi 0, %s49
      %s53 = sphi 0, %s52
      %s69 = sphi 0, %s53
      %s77 = sphi 0, %s79
      %s80 = sphi 0, %s77
      %s81 = sphi 0, %s80
      %s97 = sphi 0, %s81
      %s103 = sphi 0, %s105
      %s106 = sphi 0, %s103
      %s107 = sphi 0, %s106
      %s123 = sphi 0, %s107
      %s129 = sphi 0, %s131
      %s132 = sphi 0, %s129
      %s133 = sphi 0, %s132
      %s149 = sphi 0, %s133
      %s157 = sphi 0, %s159
      %s160 = sphi 0, %s157
      %s161 = sphi 0, %s160
      %s177 = sphi 0, %s161
      %s185 = sphi 0, %s187
      %s188 = sphi 0, %s185
      %s189 = sphi 0, %s188
      %s205 = sphi 0, %s189
    $region4: #{tpu_custom_call.1} parent=1 // loop_header_branch
      %28 = sbr.rel (%p26) target = $region8
    $region5: #{tpu_custom_call.1} parent=1 // loop_body
      %s30 = ssub.s32 %s25, 1
      %s31 = ssub.s32 %s25, 2
      %s38 = sadd.s32 1, %s33
      %p39 = scmp.ge.s32.totalorder %s38, 2
      %s40 = scalar_select %p39, 0, %s38
      %s41 = sadd.s32 1, %s32
      %s42 = scalar_select %p39, %s41, %s32
      %p43 = scmp.ge.s32.totalorder %s42, 1
      %s44 = scalar_select %p43, 0, %s42
      %s45 = ssub.s32 %s33, %s40
      %s46 = ssub.s32 %s32, %s44
      %s47 = sor.u32 %s45, %s46
      %p48 = scmp.eq.s32.totalorder %s47, 0
      %s50 = sadd.s32 %s49, 1
      %s51 = scalar_select %p48, %s49, %s50
      %p54 = pneg %p48
      %p55 = scmp.eq.s32.totalorder %s25, 1
      %p56 = por %p54, %p55
      %p57 = scmp.ne.s32.totalorder %s49, %s52
      %p58 = scmp.eq.s32.totalorder %s25, 0
      %p59 = por %p57, %p58
      %p60 = scmp.ne.s32.totalorder %s49, %s52
      %p61 = scmp.eq.s32.totalorder %s30, 1
      %p62 = por %p60, %p61
      %p63 = scmp.ne.s32.totalorder %s52, %s53
      %p64 = scmp.eq.s32.totalorder %s30, 0
      %p65 = por %p63, %p64
      %p66 = scmp.ne.s32.totalorder %s52, %s53
      %p67 = scmp.eq.s32.totalorder %s31, 1
      %p68 = por %p66, %p67
      %p70 = scmp.ne.s32.totalorder %s53, %s69
      %p71 = scmp.eq.s32.totalorder %s31, 0
      %p72 = por %p70, %p71
      %s73 = ssub.s32 %s33, %s40
      %s74 = ssub.s32 %s32, %s44
      %s75 = sor.u32 %s73, %s74
      %p76 = scmp.eq.s32.totalorder %s75, 0
      %s78 = sadd.s32 %s77, 1
      %s79 = scalar_select %p76, %s77, %s78
      %p82 = pneg %p76
      %p83 = scmp.eq.s32.totalorder %s25, 1
      %p84 = por %p82, %p83
      %p85 = scmp.ne.s32.totalorder %s77, %s80
      %p86 = scmp.eq.s32.totalorder %s25, 0
      %p87 = por %p85, %p86
      %p88 = scmp.ne.s32.totalorder %s77, %s80
      %p89 = scmp.eq.s32.totalorder %s30, 1
      %p90 = por %p88, %p89
      %p91 = scmp.ne.s32.totalorder %s80, %s81
      %p92 = scmp.eq.s32.totalorder %s30, 0
      %p93 = por %p91, %p92
      %p94 = scmp.ne.s32.totalorder %s80, %s81
      %p95 = scmp.eq.s32.totalorder %s31, 1
      %p96 = por %p94, %p95
      %p98 = scmp.ne.s32.totalorder %s81, %s97
      %p99 = scmp.eq.s32.totalorder %s31, 0
      %p100 = por %p98, %p99
      %s101 = ssub.s32 %s32, %s44
      %p102 = scmp.eq.s32.totalorder %s101, 0
      %s104 = sadd.s32 %s103, 1
      %s105 = scalar_select %p102, %s103, %s104
      %p108 = pneg %p102
      %p109 = scmp.eq.s32.totalorder %s25, 1
      %p110 = por %p108, %p109
      %p111 = scmp.ne.s32.totalorder %s103, %s106
      %p112 = scmp.eq.s32.totalorder %s25, 0
      %p113 = por %p111, %p112
      %p114 = scmp.ne.s32.totalorder %s103, %s106
      %p115 = scmp.eq.s32.totalorder %s30, 1
      %p116 = por %p114, %p115
      %p117 = scmp.ne.s32.totalorder %s106, %s107
      %p118 = scmp.eq.s32.totalorder %s30, 0
      %p119 = por %p117, %p118
      %p120 = scmp.ne.s32.totalorder %s106, %s107
      %p121 = scmp.eq.s32.totalorder %s31, 1
      %p122 = por %p120, %p121
      %p124 = scmp.ne.s32.totalorder %s107, %s123
      %p125 = scmp.eq.s32.totalorder %s31, 0
      %p126 = por %p124, %p125
      %s127 = ssub.s32 %s32, %s44
      %p128 = scmp.eq.s32.totalorder %s127, 0
      %s130 = sadd.s32 %s129, 1
      %s131 = scalar_select %p128, %s129, %s130
      %p134 = pneg %p128
      %p135 = scmp.eq.s32.totalorder %s25, 1
      %p136 = por %p134, %p135
      %p137 = scmp.ne.s32.totalorder %s129, %s132
      %p138 = scmp.eq.s32.totalorder %s25, 0
      %p139 = por %p137, %p138
      %p140 = scmp.ne.s32.totalorder %s129, %s132
      %p141 = scmp.eq.s32.totalorder %s30, 1
      %p142 = por %p140, %p141
      %p143 = scmp.ne.s32.totalorder %s132, %s133
      %p144 = scmp.eq.s32.totalorder %s30, 0
      %p145 = por %p143, %p144
      %p146 = scmp.ne.s32.totalorder %s132, %s133
      %p147 = scmp.eq.s32.totalorder %s31, 1
      %p148 = por %p146, %p147
      %p150 = scmp.ne.s32.totalorder %s133, %s149
      %p151 = scmp.eq.s32.totalorder %s31, 0
      %p152 = por %p150, %p151
      %s153 = ssub.s32 %s33, %s40
      %s154 = ssub.s32 %s32, %s44
      %s155 = sor.u32 %s153, %s154
      %p156 = scmp.eq.s32.totalorder %s155, 0
      %s158 = sadd.s32 %s157, 1
      %s159 = scalar_select %p156, %s157, %s158
      %p162 = pneg %p156
      %p163 = scmp.eq.s32.totalorder %s25, 1
      %p164 = por %p162, %p163
      %p165 = scmp.ne.s32.totalorder %s157, %s160
      %p166 = scmp.eq.s32.totalorder %s25, 0
      %p167 = por %p165, %p166
      %p168 = scmp.ne.s32.totalorder %s157, %s160
      %p169 = scmp.eq.s32.totalorder %s30, 1
      %p170 = por %p168, %p169
      %p171 = scmp.ne.s32.totalorder %s160, %s161
      %p172 = scmp.eq.s32.totalorder %s30, 0
      %p173 = por %p171, %p172
      %p174 = scmp.ne.s32.totalorder %s160, %s161
      %p175 = scmp.eq.s32.totalorder %s31, 1
      %p176 = por %p174, %p175
      %p178 = scmp.ne.s32.totalorder %s161, %s177
      %p179 = scmp.eq.s32.totalorder %s31, 0
      %p180 = por %p178, %p179
      %s181 = ssub.s32 %s33, %s40
      %s182 = ssub.s32 %s32, %s44
      %s183 = sor.u32 %s181, %s182
      %p184 = scmp.eq.s32.totalorder %s183, 0
      %s186 = sadd.s32 %s185, 1
      %s187 = scalar_select %p184, %s185, %s186
      %p190 = pneg %p184
      %p191 = scmp.eq.s32.totalorder %s25, 1
      %p192 = por %p190, %p191
      %p193 = scmp.ne.s32.totalorder %s185, %s188
      %p194 = scmp.eq.s32.totalorder %s25, 0
      %p195 = por %p193, %p194
      %p196 = scmp.ne.s32.totalorder %s185, %s188
      %p197 = scmp.eq.s32.totalorder %s30, 1
      %p198 = por %p196, %p197
      %p199 = scmp.ne.s32.totalorder %s188, %s189
      %p200 = scmp.eq.s32.totalorder %s30, 0
      %p201 = por %p199, %p200
      %p202 = scmp.ne.s32.totalorder %s188, %s189
      %p203 = scmp.eq.s32.totalorder %s31, 1
      %p204 = por %p202, %p203
      %p206 = scmp.ne.s32.totalorder %s189, %s205
      %p207 = scmp.eq.s32.totalorder %s31, 0
      %p208 = por %p206, %p207
      %p209 = scmp.le.s32.totalorder 1, %s25
      %p210 = scmp.lt.s32.totalorder %s25, 3
      %p211 = pnand %p209, %p210
      %p212 = pneg %p211
      // Predicated region
      $region9: #{tpu_custom_call.1} parent=5 // pred_check
        _
      $region10: #{tpu_custom_call.1} parent=5 // pred_check_branch
        %214 = sbr.rel (%p211) target = $region12
      $region11: #{tpu_custom_call.1} parent=5 // pred_region
        %s215 = ssub.s32 %s25, 1
        // Predicated region
        $region13: #{tpu_custom_call.1} parent=11 // pred_check
          %p216 = pneg %p119
        $region14: #{tpu_custom_call.1} parent=11 // pred_check_branch
          %218 = sbr.rel (%p216) target = $region16
        $region15: #{tpu_custom_call.1} parent=11 // pred_region
          %220 = vsyncadd [#allocation6], 0
          %s221 = smul.addr %s34, 8
          %s222 = scalar_lea.hbm %s2, %s221
          %s224 = sshll.u32 %s222, 4
          %s225 = int_to_ptr.hbm [resolvable:$true] %s224
          %s226 = sshll.u32 [#allocation7], 4
          %s227 = int_to_ptr.vmem [resolvable:$true] %s226
          %229 = dma.hbm_to_vmem [thread:$0]  %s225, 128, %s227, [#allocation6]
        $region16: #{tpu_custom_call.1} parent=11 // pred_fallthru
          _
        // Predicated region
        $region17: #{tpu_custom_call.1} parent=11 // pred_check
          %p230 = pneg %p145
        $region18: #{tpu_custom_call.1} parent=11 // pred_check_branch
          %232 = sbr.rel (%p230) target = $region20
        $region19: #{tpu_custom_call.1} parent=11 // pred_region
          %234 = vsyncadd [#allocation9], 0
          %s235 = smul.addr %s34, 8
          %s236 = scalar_lea.hbm %s3, %s235
          %s238 = sshll.u32 %s236, 4
          %s239 = int_to_ptr.hbm [resolvable:$true] %s238
          %s240 = sshll.u32 [#allocation8], 4
          %s241 = int_to_ptr.vmem [resolvable:$true] %s240
          %243 = dma.hbm_to_vmem [thread:$0]  %s239, 128, %s241, [#allocation9]
        $region20: #{tpu_custom_call.1} parent=11 // pred_fallthru
          _
      $region12: #{tpu_custom_call.1} parent=5 // pred_fallthru
        _
      %p244 = scmp.lt.s32.totalorder %s25, 2
      // Predicated region
      $region21: #{tpu_custom_call.1} parent=5 // pred_check
        %p245 = pneg %p244
      $region22: #{tpu_custom_call.1} parent=5 // pred_check_branch
        %247 = sbr.rel (%p245) target = $region24
      $region23: #{tpu_custom_call.1} parent=5 // pred_region
        // Predicated region
        $region25: #{tpu_custom_call.1} parent=23 // pred_check
          %p248 = pneg %p59
        $region26: #{tpu_custom_call.1} parent=23 // pred_check_branch
          %250 = sbr.rel (%p248) target = $region28
        $region27: #{tpu_custom_call.1} parent=23 // pred_region
          %s251 = sand.u32 %s49, 1
          %s252 = scalar_lea.sflag [#allocation3], %s251
          %s253 = sand.u32 %s49, 1
          %s254 = smul.addr %s253, 32
          %s255 = scalar_lea.vmem [#allocation2], %s254
          %s256 = smul.u32 4, %s33
          %258 = vsyncadd %s252, 0
          %s259 = sadd.s32 %s32, %s256
          %s260 = smul.addr %s259, 8
          %s261 = scalar_lea.hbm %s0, %s260
          %s262 = sshll.u32 %s261, 4
          %s263 = int_to_ptr.hbm [resolvable:$true] %s262
          %s264 = sshll.u32 %s255, 4
          %s265 = int_to_ptr.vmem [resolvable:$true] %s264
          %270 = dma.hbm_to_vmem [thread:$0]  %s263, 512, %s265, %s252, 128, 128, 8
        $region28: #{tpu_custom_call.1} parent=23 // pred_fallthru
          _
        // Predicated region
        $region29: #{tpu_custom_call.1} parent=23 // pred_check
          %p271 = pneg %p87
        $region30: #{tpu_custom_call.1} parent=23 // pred_check_branch
          %273 = sbr.rel (%p271) target = $region32
        $region31: #{tpu_custom_call.1} parent=23 // pred_region
          %s274 = sand.u32 %s25, 1
          %s275 = scalar_lea.sflag [#allocation6], %s274
          %s276 = sand.u32 %s77, 1
          %s277 = smul.addr %s276, 32
          %s278 = scalar_lea.vmem [#allocation5], %s277
          %s279 = smul.u32 4, %s33
          %281 = vsyncadd %s275, 0
          %s282 = sadd.s32 %s32, %s279
          %s283 = smul.addr %s282, 8
          %s284 = scalar_lea.hbm %s1, %s283
          %s285 = sshll.u32 %s284, 4
          %s286 = int_to_ptr.hbm [resolvable:$true] %s285
          %s287 = sshll.u32 %s278, 4
          %s288 = int_to_ptr.vmem [resolvable:$true] %s287
          %293 = dma.hbm_to_vmem [thread:$0]  %s286, 512, %s288, %s275, 128, 128, 8
        $region32: #{tpu_custom_call.1} parent=23 // pred_fallthru
          _
      $region24: #{tpu_custom_call.1} parent=5 // pred_fallthru
        _
      %p294 = scmp.le.s32.totalorder 1, %s25
      %p295 = scmp.lt.s32.totalorder %s25, 3
      %p296 = pnand %p294, %p295
      %p297 = pneg %p296
      // Predicated region
      $region33: #{tpu_custom_call.1} parent=5 // pred_check
        _
      $region34: #{tpu_custom_call.1} parent=5 // pred_check_branch
        %299 = sbr.rel (%p296) target = $region36
      $region35: #{tpu_custom_call.1} parent=5 // pred_region
        %s300 = ssub.s32 %s25, 1
        %s301 = sand.u32 %s52, 1
        %s302 = scalar_lea.sflag [#allocation3], %s301
        %s303 = sand.u32 %s52, 1
        %s304 = smul.addr %s303, 32
        %s305 = scalar_lea.vmem [#allocation2], %s304
        // Predicated region
        $region37: #{tpu_custom_call.1} parent=35 // pred_check
          %p306 = pneg %p65
        $region38: #{tpu_custom_call.1} parent=35 // pred_check_branch
          %308 = sbr.rel (%p306) target = $region40
        $region39: #{tpu_custom_call.1} parent=35 // pred_region
          %310 = dma.done %s302, 512
        $region40: #{tpu_custom_call.1} parent=35 // pred_fallthru
          _
        %s311 = sand.u32 %s30, 1
        %s312 = scalar_lea.sflag [#allocation6], %s311
        %s313 = sand.u32 %s80, 1
        %s314 = smul.addr %s313, 32
        %s315 = scalar_lea.vmem [#allocation5], %s314
        // Predicated region
        $region41: #{tpu_custom_call.1} parent=35 // pred_check
          %p316 = pneg %p93
        $region42: #{tpu_custom_call.1} parent=35 // pred_check_branch
          %318 = sbr.rel (%p316) target = $region44
        $region43: #{tpu_custom_call.1} parent=35 // pred_region
          %320 = dma.done %s312, 512
        $region44: #{tpu_custom_call.1} parent=35 // pred_fallthru
          _
        // Predicated region
        $region45: #{tpu_custom_call.1} parent=35 // pred_check
          %p321 = pneg %p119
        $region46: #{tpu_custom_call.1} parent=35 // pred_check_branch
          %323 = sbr.rel (%p321) target = $region48
        $region47: #{tpu_custom_call.1} parent=35 // pred_region
          %325 = dma.done [#allocation6], 128
        $region48: #{tpu_custom_call.1} parent=35 // pred_fallthru
          _
        // Predicated region
        $region49: #{tpu_custom_call.1} parent=35 // pred_check
          %p326 = pneg %p145
        $region50: #{tpu_custom_call.1} parent=35 // pred_check_branch
          %328 = sbr.rel (%p326) target = $region52
        $region51: #{tpu_custom_call.1} parent=35 // pred_region
          %330 = dma.done [#allocation9], 128
        $region52: #{tpu_custom_call.1} parent=35 // pred_fallthru
          _
        %s331 = sand.u32 %s52, 1
        %s332 = scalar_lea.sflag [#allocation3], %s331
        %s333 = sand.u32 %s52, 1
        %s334 = smul.addr %s333, 32
        %s335 = scalar_lea.vmem [#allocation2], %s334
        %p336 = pneg %p65
        %p337 = pneg %p62
        %s338 = sand.u32 %s30, 1
        %s339 = scalar_lea.sflag [#allocation6], %s338
        %s340 = sand.u32 %s80, 1
        %s341 = smul.addr %s340, 32
        %s342 = scalar_lea.vmem [#allocation5], %s341
        %p343 = pneg %p93
        %p344 = pneg %p90
        %p345 = pneg %p119
        %p346 = pneg %p116
        %p347 = pneg %p145
        %p348 = pneg %p142
        %p349 = pneg %p173
        %p350 = pneg %p170
        %s351 = sand.u32 %s160, 1
        %s352 = scalar_lea.sflag [#allocation4], %s351
        %s353 = sand.u32 %s160, 1
        %s354 = smul.addr %s353, 32
        %s355 = scalar_lea.vmem [#allocation10], %s354
        %p356 = pneg %p201
        %p357 = pneg %p198
        %s358 = sand.u32 %s188, 1
        %s359 = scalar_lea.sflag [#allocation12], %s358
        %s360 = sand.u32 %s188, 1
        %s361 = smul.addr %s360, 32
        %s362 = scalar_lea.vmem [#allocation11], %s361
        %s363 = smul.u32 4, %s35
        %s364 = smul.u32 4, %s35
        %s365 = smul.u32 4, %s35
        %s366 = smul.u32 4, %s35
        %v367 = vld [vmem:[#allocation7] sm:$0xff]
        %v368 = vld [vmem:[#allocation8] sm:$0xff]
        %v369 = vld [vmem:[%s305] sm:$0xff]
        %v370 = vmul.f32 %v369, %v367
        %371 = vrot.lane.b32.xlu0 %v369, 64
        %v372 = vpop.permute.xlu0 %371
        %v373 = vmul.f32 %v372, %v368
        %v374 = vadd.f32 %v370, %v373
        %375 = vst [vmem:[%s355] sm:$0xff] %v374
        %s376 = scalar_lea.vmem %s305, 8 [#allocation2]
        %v377 = vld [vmem:[%s376] sm:$0xff]
        %v378 = vmul.f32 %v377, %v367
        %379 = vrot.lane.b32.xlu0 %v377, 64
        %v380 = vpop.permute.xlu0 %379
        %v381 = vmul.f32 %v380, %v368
        %v382 = vadd.f32 %v378, %v381
        %s383 = scalar_lea.vmem %s355, 8 [#allocation10]
        %384 = vst [vmem:[%s383] sm:$0xff] %v382
        %s385 = scalar_lea.vmem %s305, 16 [#allocation2]
        %v386 = vld [vmem:[%s385] sm:$0xff]
        %v387 = vmul.f32 %v386, %v367
        %388 = vrot.lane.b32.xlu0 %v386, 64
        %v389 = vpop.permute.xlu0 %388
        %v390 = vmul.f32 %v389, %v368
        %v391 = vadd.f32 %v387, %v390
        %s392 = scalar_lea.vmem %s355, 16 [#allocation10]
        %393 = vst [vmem:[%s392] sm:$0xff] %v391
        %s394 = scalar_lea.vmem %s305, 24 [#allocation2]
        %v395 = vld [vmem:[%s394] sm:$0xff]
        %v396 = vmul.f32 %v395, %v367
        %397 = vrot.lane.b32.xlu0 %v395, 64
        %v398 = vpop.permute.xlu0 %397
        %v399 = vmul.f32 %v398, %v368
        %v400 = vadd.f32 %v396, %v399
        %s401 = scalar_lea.vmem %s355, 24 [#allocation10]
        %402 = vst [vmem:[%s401] sm:$0xff] %v400
        %v403 = vld [vmem:[%s315] sm:$0xff]
        %v404 = vmul.f32 %v403, %v367
        %405 = vrot.lane.b32.xlu0 %v403, 64
        %v406 = vpop.permute.xlu0 %405
        %v407 = vmul.f32 %v406, %v368
        %v408 = vadd.f32 %v404, %v407
        %409 = vst [vmem:[%s362] sm:$0xff] %v408
        %s410 = scalar_lea.vmem %s315, 8 [#allocation5]
        %v411 = vld [vmem:[%s410] sm:$0xff]
        %v412 = vmul.f32 %v411, %v367
        %413 = vrot.lane.b32.xlu0 %v411, 64
        %v414 = vpop.permute.xlu0 %413
        %v415 = vmul.f32 %v414, %v368
        %v416 = vadd.f32 %v412, %v415
        %s417 = scalar_lea.vmem %s362, 8 [#allocation11]
        %418 = vst [vmem:[%s417] sm:$0xff] %v416
        %s419 = scalar_lea.vmem %s315, 16 [#allocation5]
        %v420 = vld [vmem:[%s419] sm:$0xff]
        %v421 = vmul.f32 %v420, %v367
        %422 = vrot.lane.b32.xlu0 %v420, 64
        %v423 = vpop.permute.xlu0 %422
        %v424 = vmul.f32 %v423, %v368
        %v425 = vadd.f32 %v421, %v424
        %s426 = scalar_lea.vmem %s362, 16 [#allocation11]
        %427 = vst [vmem:[%s426] sm:$0xff] %v425
        %s428 = scalar_lea.vmem %s315, 24 [#allocation5]
        %v429 = vld [vmem:[%s428] sm:$0xff]
        %v430 = vmul.f32 %v429, %v367
        %431 = vrot.lane.b32.xlu0 %v429, 64
        %v432 = vpop.permute.xlu0 %431
        %v433 = vmul.f32 %v432, %v368
        %v434 = vadd.f32 %v430, %v433
        %s435 = scalar_lea.vmem %s362, 24 [#allocation11]
        %436 = vst [vmem:[%s435] sm:$0xff] %v434
        %s437 = sand.u32 %s160, 1
        %s438 = scalar_lea.sflag [#allocation4], %s437
        %s439 = sand.u32 %s160, 1
        %s440 = smul.addr %s439, 32
        %s441 = scalar_lea.vmem [#allocation10], %s440
        %s442 = sand.u32 %s188, 1
        %s443 = scalar_lea.sflag [#allocation12], %s442
        %s444 = sand.u32 %s188, 1
        %s445 = smul.addr %s444, 32
        %s446 = scalar_lea.vmem [#allocation11], %s445
        // Predicated region
        $region53: #{tpu_custom_call.1} parent=35 // pred_check
          %p447 = pneg %p170
        $region54: #{tpu_custom_call.1} parent=35 // pred_check_branch
          %449 = sbr.rel (%p447) target = $region56
        $region55: #{tpu_custom_call.1} parent=35 // pred_region
          %s450 = smul.u32 4, %s35
          %452 = vsyncadd %s438, 0
          %s453 = sadd.s32 %s34, %s450
          %s454 = smul.addr %s453, 8
          %s455 = scalar_lea.hbm %s4, %s454
          %s456 = sshll.u32 %s441, 4
          %s457 = int_to_ptr.vmem [resolvable:$true] %s456
          %s458 = sshll.u32 %s455, 4
          %s459 = int_to_ptr.hbm [resolvable:$true] %s458
          %464 = dma.vmem_to_hbm [thread:$0]  %s457, 512, %s459, %s438, 128, 128, 8
        $region56: #{tpu_custom_call.1} parent=35 // pred_fallthru
          _
        // Predicated region
        $region57: #{tpu_custom_call.1} parent=35 // pred_check
          %p465 = pneg %p198
        $region58: #{tpu_custom_call.1} parent=35 // pred_check_branch
          %467 = sbr.rel (%p465) target = $region60
        $region59: #{tpu_custom_call.1} parent=35 // pred_region
          %s468 = smul.u32 4, %s35
          %470 = vsyncadd %s443, 0
          %s471 = sadd.s32 %s34, %s468
          %s472 = smul.addr %s471, 8
          %s473 = scalar_lea.hbm %s5, %s472
          %s474 = sshll.u32 %s446, 4
          %s475 = int_to_ptr.vmem [resolvable:$true] %s474
          %s476 = sshll.u32 %s473, 4
          %s477 = int_to_ptr.hbm [resolvable:$true] %s476
          %482 = dma.vmem_to_hbm [thread:$0]  %s475, 512, %s477, %s443, 128, 128, 8
        $region60: #{tpu_custom_call.1} parent=35 // pred_fallthru
          _
      $region36: #{tpu_custom_call.1} parent=5 // pred_fallthru
        _
      %p483 = scmp.le.s32.totalorder 2, %s25
      // Predicated region
      $region61: #{tpu_custom_call.1} parent=5 // pred_check
        %p484 = pneg %p483
      $region62: #{tpu_custom_call.1} parent=5 // pred_check_branch
        %486 = sbr.rel (%p484) target = $region64
      $region63: #{tpu_custom_call.1} parent=5 // pred_region
        %s487 = ssub.s32 %s25, 2
        // Predicated region
        $region65: #{tpu_custom_call.1} parent=63 // pred_check
          %p488 = pneg %p176
        $region66: #{tpu_custom_call.1} parent=63 // pred_check_branch
          %490 = sbr.rel (%p488) target = $region68
        $region67: #{tpu_custom_call.1} parent=63 // pred_region
          %s491 = sand.u32 %s161, 1
          %s492 = scalar_lea.sflag [#allocation4], %s491
          %s493 = sand.u32 %s161, 1
          %s494 = smul.addr %s493, 32
          %s495 = scalar_lea.vmem [#allocation10], %s494
          %497 = dma.done %s492, 512
        $region68: #{tpu_custom_call.1} parent=63 // pred_fallthru
          _
        // Predicated region
        $region69: #{tpu_custom_call.1} parent=63 // pred_check
          %p498 = pneg %p204
        $region70: #{tpu_custom_call.1} parent=63 // pred_check_branch
          %500 = sbr.rel (%p498) target = $region72
        $region71: #{tpu_custom_call.1} parent=63 // pred_region
          %s501 = sand.u32 %s189, 1
          %s502 = scalar_lea.sflag [#allocation12], %s501
          %s503 = sand.u32 %s189, 1
          %s504 = smul.addr %s503, 32
          %s505 = scalar_lea.vmem [#allocation11], %s504
          %507 = dma.done %s502, 512
        $region72: #{tpu_custom_call.1} parent=63 // pred_fallthru
          _
      $region64: #{tpu_custom_call.1} parent=5 // pred_fallthru
        _
    $region6: #{tpu_custom_call.1} parent=1 // loop_footer
      %s29 = sadd.s32 1, %s25
    $region7: #{tpu_custom_call.1} parent=1 // loop_footer_branch
      %24 = sbr.rel target = $region3
    $region8: #{tpu_custom_call.1} parent=1 // loop_exit
      _
    %508 = vsyncpa [#allocation3], 1
    %s509 = scalar_lea.sflag [#allocation3], 1
    %510 = vsyncpa %s509, 1
    %511 = vsyncpa [#allocation6], 1
    %s512 = scalar_lea.sflag [#allocation6], 1
    %513 = vsyncpa %s512, 1
    %514 = vsyncpa [#allocation9], 1
    %515 = vsyncpa [#allocation4], 1
    %s516 = scalar_lea.sflag [#allocation4], 1
    %517 = vsyncpa %s516, 1
    %518 = vsyncpa [#allocation12], 1
    %s519 = scalar_lea.sflag [#allocation12], 1
    %520 = vsyncpa %s519, 1

</llo_original>
